<compile_context>
chip_gen: v6e
topology: v6e:2x2x1
jax: 0.10.0
libtpu: 0.0.40
codegen_flags: <defaults>
</compile_context>

<pallas_src>
import functools
import numpy as np
import jax
import jax.numpy as jnp
from jax.experimental import pallas as pl
from jax.experimental.pallas import tpu as pltpu

# Finite "-inf" so masked scores can never produce NaN (exp underflows to exactly 0).
_MASK_VALUE = -0.7 * float(np.finfo(np.float32).max)

# Explicit scoped-VMEM limit: > v5e's ~16 MiB default, < v7x's 64 MiB physical (headroom).
_VMEM_LIMIT_BYTES = 48 * 1024 * 1024


def _resident_spec(shape):
    """Grid-invariant (weight/bias) block: constant index_map -> fetched once and kept
    resident. Single-buffered (pl.Buffered(1)) since double buffering buys nothing for a
    block whose index never changes; halves resident weight VMEM."""
    index_map = lambda *args: (0,) * len(shape)
    if hasattr(pl, "Buffered"):
        try:
            return pl.BlockSpec(shape, index_map, pipeline_mode=pl.Buffered(1))
        except TypeError:
            pass
    return pl.BlockSpec(shape, index_map)


# ----------------------------------------------------------------------------------------
# Kernel 1: fused QKV projection, run once per token (never recomputed by the kv loop).
# Writes head-major Q/K/V (B, H, S, Dh) in the MXU compute dtype; 1/sqrt(Dh) folded into Q.
# ----------------------------------------------------------------------------------------
def _qkv_proj_kernel(x_ref, wqkv_ref, bqkv_ref, q_ref, k_ref, v_ref,
                     *, num_heads, per_head_dim, scale):
    H, Dh = num_heads, per_head_dim
    D = H * Dh
    ts = x_ref.shape[1]

    x = x_ref[0]                                                        # (ts, D), compute dtype
    qkv = jnp.dot(x, wqkv_ref[...], preferred_element_type=jnp.float32) + bqkv_ref[...]

    def to_heads(m):                                                    # (ts, D) -> (H, ts, Dh)
        # Per-head lane slices, done ONCE per token here (hot kv loop has no relayout).
        return jnp.stack([m[:, h * Dh:(h + 1) * Dh] for h in range(H)], axis=0)

    q_ref[0] = to_heads(qkv[:, 0:D] * scale).astype(q_ref.dtype)        # scale folded into Q
    k_ref[0] = to_heads(qkv[:, D:2 * D]).astype(k_ref.dtype)
    v_ref[0] = to_heads(qkv[:, 2 * D:3 * D]).astype(v_ref.dtype)


# ----------------------------------------------------------------------------------------
# Kernel 2: causal flash attention (online softmax) + fused output projection.
# Grid axis 1 enumerates only lower-triangular (q-tile, kv-tile) pairs via SMEM tables.
# ----------------------------------------------------------------------------------------
def _flash_attn_kernel(qtab_ref, ktab_ref, q_ref, k_ref, v_ref, wo_ref, bo_ref,
                       out_ref, acc_scr, m_scr, l_scr,
                       *, num_heads, per_head_dim, compute_dtype):
    H, Dh = num_heads, per_head_dim
    D = H * Dh
    cd = compute_dtype
    tq = q_ref.shape[2]
    tk = k_ref.shape[2]

    t = pl.program_id(1)
    qi = qtab_ref[t]
    ki = ktab_ref[t]

    # ---- first kv tile of this q tile: reset online-softmax state ----
    @pl.when(ki == 0)
    def _init():
        m_scr[...] = jnp.full(m_scr.shape, -jnp.inf, jnp.float32)
        l_scr[...] = jnp.zeros(l_scr.shape, jnp.float32)
        acc_scr[...] = jnp.zeros(acc_scr.shape, jnp.float32)

    q = q_ref[0]                                  # (H, tq, Dh), scale already folded in
    k = k_ref[0]                                  # (H, tk, Dh)
    v = v_ref[0]                                  # (H, tk, Dh)

    def _online_softmax_step(apply_mask):
        # Scores for all heads at once; K^T folded into the contraction.
        s = jnp.einsum('hqd,hkd->hqk', q, k, preferred_element_type=jnp.float32)
        if apply_mask:
            q_ids = qi * tq + jax.lax.broadcasted_iota(jnp.int32, (tq, tk), 0)
            k_ids = ki * tk + jax.lax.broadcasted_iota(jnp.int32, (tq, tk), 1)
            s = jnp.where((k_ids > q_ids)[None], _MASK_VALUE, s)
        m_prev = m_scr[...]
        m_new = jnp.maximum(m_prev, jnp.max(s, axis=-1, keepdims=True))  # (H, tq, 1)
        alpha = jnp.exp(m_prev - m_new)
        p = jnp.exp(s - m_new)
        l_scr[...] = alpha * l_scr[...] + jnp.sum(p, axis=-1, keepdims=True)
        acc_scr[...] = alpha * acc_scr[...] + jnp.einsum(
            'hqk,hkd->hqd', p.astype(cd), v, preferred_element_type=jnp.float32)
        m_scr[...] = m_new

    # Only diagonal-crossing tiles pay for iota/compare/select; fully-visible tiles skip it.
    needs_mask = ki * tk + (tk - 1) > qi * tq

    @pl.when(needs_mask)
    def _masked():
        _online_softmax_step(True)

    @pl.when(jnp.logical_not(needs_mask))
    def _unmasked():
        _online_softmax_step(False)

    # ---- last kv tile for this q tile: normalize + fused output projection ----
    last_ki = (qi * tq + (tq - 1)) // tk

    @pl.when(ki == last_ki)
    def _finalize():
        inv_l = pl.reciprocal(l_scr[...], approx=True)            # EUP vrcp, (H, tq, 1)
        o = acc_scr[...] * inv_l                                   # (H, tq, Dh) f32
        # Merge heads once (concat of static slices == PyTorch transpose+view layout),
        # then ONE (tq, D) x (D, D) matmul: full contraction depth, single MXU drain.
        o2d = jnp.concatenate([o[h] for h in range(H)], axis=1).astype(cd)   # (tq, D)
        u = jnp.dot(o2d, wo_ref[...], preferred_element_type=jnp.float32) + bo_ref[...]
        out_ref[0] = u.astype(out_ref.dtype)


def multi_head_attention(h, wq, bq, wk, bk, wv, bv, wo, bo, *,
                         num_heads, per_head_dim,
                         block_q=128, block_k=128,
                         compute_dtype=jnp.float32):
    # Note: on v6e/v7x block_k=256 (and block_q=256 if VMEM allows) better fills the
    # 256-wide MXU; 128 matches v5e's MXU and is the safe default across chips.
    B, S, D = h.shape
    H, Dh = num_heads, per_head_dim
    assert H * Dh == D
    tq = min(block_q, S)
    tk = min(block_k, S)
    assert S % tq == 0 and S % tk == 0
    cd = compute_dtype
    scale = 1.0 / float(np.sqrt(Dh))

    # Cast/concatenate weights ONCE in XLA (no per-grid-step .astype inside the kernels).
    h_c = h.astype(cd)
    wqkv = jnp.concatenate([wq, wk, wv], axis=1).astype(cd)            # (D, 3D)
    bqkv = jnp.concatenate([bq, bk, bv]).reshape(1, 3 * D).astype(jnp.float32)
    wo_c = wo.astype(cd)                                               # (D, D)
    bo2 = bo.reshape(1, D).astype(jnp.float32)

    nq = S // tq
    nk = S // tk

    # ------------------- Kernel 1: QKV projection (once per token) -------------------
    q_hm, k_hm, v_hm = pl.pallas_call(
        functools.partial(_qkv_proj_kernel, num_heads=H, per_head_dim=Dh, scale=scale),
        out_shape=(jax.ShapeDtypeStruct((B, H, S, Dh), cd),
                   jax.ShapeDtypeStruct((B, H, S, Dh), cd),
                   jax.ShapeDtypeStruct((B, H, S, Dh), cd)),
        grid_spec=pltpu.PrefetchScalarGridSpec(
            num_scalar_prefetch=0,
            grid=(B, nq),
            in_specs=[
                pl.BlockSpec((1, tq, D), lambda bi, si: (bi, si, 0)),
                _resident_spec((D, 3 * D)),
                _resident_spec((1, 3 * D)),
            ],
            out_specs=(
                pl.BlockSpec((1, H, tq, Dh), lambda bi, si: (bi, 0, si, 0)),
                pl.BlockSpec((1, H, tq, Dh), lambda bi, si: (bi, 0, si, 0)),
                pl.BlockSpec((1, H, tq, Dh), lambda bi, si: (bi, 0, si, 0)),
            )),
        compiler_params=pltpu.CompilerParams(
            dimension_semantics=("parallel", "parallel"),
            vmem_limit_bytes=_VMEM_LIMIT_BYTES),
    )(h_c, wqkv, bqkv)

    # ------------- Kernel 2: causal flash attention + output projection --------------
    # Enumerate only lower-triangular (q-tile, kv-tile) pairs; the scalar-prefetched
    # qi/ki tables drive the index_maps and the in-kernel init/mask/finalize decisions.
    pairs = [(qi, ki) for qi in range(nq) for ki in range(nk)
             if ki * tk <= qi * tq + (tq - 1)]
    qtab = jnp.asarray([p[0] for p in pairs], dtype=jnp.int32)
    ktab = jnp.asarray([p[1] for p in pairs], dtype=jnp.int32)

    out = pl.pallas_call(
        functools.partial(_flash_attn_kernel, num_heads=H, per_head_dim=Dh,
                          compute_dtype=cd),
        out_shape=jax.ShapeDtypeStruct((B, S, D), h.dtype),
        grid_spec=pltpu.PrefetchScalarGridSpec(
            num_scalar_prefetch=2,
            grid=(B, len(pairs)),
            in_specs=[
                # q tile: block index constant across consecutive kv steps -> fetched once
                # per q tile by the pipeline (no redundant DMA).
                pl.BlockSpec((1, H, tq, Dh), lambda bi, t, qt, kt: (bi, 0, qt[t], 0)),
                pl.BlockSpec((1, H, tk, Dh), lambda bi, t, qt, kt: (bi, 0, kt[t], 0)),
                pl.BlockSpec((1, H, tk, Dh), lambda bi, t, qt, kt: (bi, 0, kt[t], 0)),
                _resident_spec((D, D)),
                _resident_spec((1, D)),
            ],
            # Lane-dense (tq, D) output slab; revisited (same index) across kv steps,
            # written only at the last kv tile of each q tile.
            out_specs=pl.BlockSpec((1, tq, D), lambda bi, t, qt, kt: (bi, qt[t], 0)),
            scratch_shapes=[
                pltpu.VMEM((H, tq, Dh), jnp.float32),   # output accumulator
                pltpu.VMEM((H, tq, 1), jnp.float32),    # running max m
                pltpu.VMEM((H, tq, 1), jnp.float32),    # running denom l
            ]),
        compiler_params=pltpu.CompilerParams(
            dimension_semantics=("parallel", "arbitrary"),
            vmem_limit_bytes=_VMEM_LIMIT_BYTES),
    )(qtab, ktab, q_hm, k_hm, v_hm, wo_c, bo2)
    return out


def reference_mha(h, wq, bq, wk, bk, wv, bv, wo, bo, *, num_heads, per_head_dim):
    """Pure-JAX reference mirroring the PyTorch forward (default path)."""
    B, S, D = h.shape
    def lin(x, w, b): return x @ w + b
    def split(x): return x.reshape(B, S, num_heads, per_head_dim).transpose(0, 2, 1, 3)
    q, k, v = split(lin(h, wq, bq)), split(lin(h, wk, bk)), split(lin(h, wv, bv))
    qk = jnp.einsum('bhsd,bhtd->bhst', q, k) / np.sqrt(per_head_dim)
    causal = jnp.triu(jnp.ones((S, S), bool), k=1)
    qk = jnp.where(causal[None, None], -jnp.inf, qk)
    p = jax.nn.softmax(qk, axis=-1)
    o = jnp.einsum('bhst,bhtd->bhsd', p, v).transpose(0, 2, 1, 3).reshape(B, S, D)
    return lin(o, wo, bo)


def _make_params(key, D):
    ks = jax.random.split(key, 8)
    s = 1.0 / np.sqrt(D)
    def u(k, shape): return jax.random.uniform(k, shape, jnp.float32, -s, s)
    return (u(ks[0], (D, D)), u(ks[1], (D,)),
            u(ks[2], (D, D)), u(ks[3], (D,)),
            u(ks[4], (D, D)), u(ks[5], (D,)),
            u(ks[6], (D, D)), u(ks[7], (D,)))


def _run_case(key, B, S, num_heads, per_head_dim):
    D = num_heads * per_head_dim
    kh, kp = jax.random.split(key)
    h = jax.random.normal(kh, (B, S, D), dtype=jnp.float32)
    params = _make_params(kp, D)
    ref = reference_mha(h, *params, num_heads=num_heads, per_head_dim=per_head_dim)

    # f32 MXU operands: matches module semantics (tolerance covers approx reciprocal).
    out_f32 = jax.block_until_ready(multi_head_attention(
        h, *params, num_heads=num_heads, per_head_dim=per_head_dim,
        compute_dtype=jnp.float32))
    np.testing.assert_allclose(np.asarray(out_f32), np.asarray(ref), atol=5e-3, rtol=5e-3)

    # bf16 MXU operands + f32 accumulation / softmax math (v5e/v6e/v7x fast path).
    out_bf16 = jax.block_until_ready(multi_head_attention(
        h, *params, num_heads=num_heads, per_head_dim=per_head_dim,
        compute_dtype=jnp.bfloat16))
    np.testing.assert_allclose(np.asarray(out_bf16), np.asarray(ref), atol=1e-1, rtol=1e-1)


if __name__ == "__main__":
    root = jax.random.PRNGKey(0)
    k1, k2 = jax.random.split(root)
    # Small config consistent with the module spec (single-tile grid per batch element).
    _run_case(k1, B=2, S=8, num_heads=4, per_head_dim=8)       # d_model = 32
    # Multi-tile config exercising flash streaming, triangular tile enumeration,
    # masked vs. unmasked kv tiles and the parallel batch axis.
    _run_case(k2, B=1, S=256, num_heads=4, per_head_dim=16)    # d_model = 64
    print("KERNEL_OK")
</pallas_src>

<mosaic_0001>
module attributes {stable_mosaic.version = 11 : i64} {
  func.func @_qkv_proj_kernel(%arg0: i32, %arg1: i32, %arg2: memref<1x8x32xf32, #tpu.memory_space<vmem>>, %arg3: memref<32x96xf32, #tpu.memory_space<vmem>>, %arg4: memref<1x96xf32, #tpu.memory_space<vmem>>, %arg5: memref<1x4x8x8xf32, #tpu.memory_space<vmem>>, %arg6: memref<1x4x8x8xf32, #tpu.memory_space<vmem>>, %arg7: memref<1x4x8x8xf32, #tpu.memory_space<vmem>>) attributes {dimension_semantics = [#tpu.dimension_semantics<parallel>, #tpu.dimension_semantics<parallel>], iteration_bounds = array<i64: 2, 1>, scalar_prefetch = 0 : i64, scratch_operands = 0 : i64, tpu.core_type = #tpu.core_type<tc>, window_params = [{transform_indices = @transform_0, window_bounds = array<i64: 1, 8, 32>}, {pipeline_mode = #tpu.pipeline_mode<synchronous>, transform_indices = @transform_1, window_bounds = array<i64: 32, 96>}, {pipeline_mode = #tpu.pipeline_mode<synchronous>, transform_indices = @transform_2, window_bounds = array<i64: 1, 96>}, {transform_indices = @transform_3, window_bounds = array<i64: 1, 4, 8, 8>}, {transform_indices = @transform_4, window_bounds = array<i64: 1, 4, 8, 8>}, {transform_indices = @transform_5, window_bounds = array<i64: 1, 4, 8, 8>}]} {
    %c0 = arith.constant 0 : index
    %c0_0 = arith.constant 0 : index
    %c0_1 = arith.constant 0 : index
    %0 = vector.load %arg2[%c0, %c0_0, %c0_1] : memref<1x8x32xf32, #tpu.memory_space<vmem>>, vector<1x8x32xf32>
    %1 = vector.shape_cast %0 : vector<1x8x32xf32> to vector<8x32xf32>
    %c0_2 = arith.constant 0 : index
    %c0_3 = arith.constant 0 : index
    %2 = vector.load %arg3[%c0_2, %c0_3] : memref<32x96xf32, #tpu.memory_space<vmem>>, vector<32x96xf32>
    %cst = arith.constant dense<0.000000e+00> : vector<8x96xf32>
    %3 = tpu.matmul %1, %2, %cst {dimension_numbers = #tpu.dot_dimension_numbers<[1], [0], [0], [1], [0, 0, 1, 1], [], []>} : vector<8x32xf32>, vector<32x96xf32>, vector<8x96xf32> -> vector<8x96xf32>
    %c0_4 = arith.constant 0 : index
    %c0_5 = arith.constant 0 : index
    %4 = vector.load %arg4[%c0_4, %c0_5] : memref<1x96xf32, #tpu.memory_space<vmem>>, vector<1x96xf32>
    %5 = vector.broadcast %4 : vector<1x96xf32> to vector<8x96xf32>
    %6 = arith.addf %3, %5 : vector<8x96xf32>
    %7 = vector.extract_strided_slice %6 {offsets = [0, 0], sizes = [8, 32], strides = [1, 1]} : vector<8x96xf32> to vector<8x32xf32>
    %cst_6 = arith.constant 0.353553385 : f32
    %8 = vector.broadcast %cst_6 : f32 to vector<8x32xf32>
    %9 = arith.mulf %7, %8 : vector<8x32xf32>
    %10 = vector.extract_strided_slice %9 {offsets = [0, 0], sizes = [8, 8], strides = [1, 1]} : vector<8x32xf32> to vector<8x8xf32>
    %11 = vector.extract_strided_slice %9 {offsets = [0, 8], sizes = [8, 8], strides = [1, 1]} : vector<8x32xf32> to vector<8x8xf32>
    %12 = vector.extract_strided_slice %9 {offsets = [0, 16], sizes = [8, 8], strides = [1, 1]} : vector<8x32xf32> to vector<8x8xf32>
    %13 = vector.extract_strided_slice %9 {offsets = [0, 24], sizes = [8, 8], strides = [1, 1]} : vector<8x32xf32> to vector<8x8xf32>
    %14 = vector.shape_cast %10 : vector<8x8xf32> to vector<1x8x8xf32>
    %15 = vector.shape_cast %11 : vector<8x8xf32> to vector<1x8x8xf32>
    %16 = vector.shape_cast %12 : vector<8x8xf32> to vector<1x8x8xf32>
    %17 = vector.shape_cast %13 : vector<8x8xf32> to vector<1x8x8xf32>
    %18 = tpu.concatenate %14, %15, %16, %17 in 0 : vector<1x8x8xf32>, vector<1x8x8xf32>, vector<1x8x8xf32>, vector<1x8x8xf32> -> vector<4x8x8xf32>
    %c0_7 = arith.constant 0 : index
    %c0_8 = arith.constant 0 : index
    %c0_9 = arith.constant 0 : index
    %c0_10 = arith.constant 0 : index
    %19 = vector.load %arg5[%c0_7, %c0_8, %c0_9, %c0_10] : memref<1x4x8x8xf32, #tpu.memory_space<vmem>>, vector<1x4x8x8xf32>
    %20 = vector.shape_cast %19 : vector<1x4x8x8xf32> to vector<4x8x8xf32>
    %21 = vector.shape_cast %18 : vector<4x8x8xf32> to vector<1x4x8x8xf32>
    tpu.vector_store %arg5[%c0_7, %c0_8, %c0_9, %c0_10], %21 {strides = array<i32>} : memref<1x4x8x8xf32, #tpu.memory_space<vmem>>, vector<1x4x8x8xf32>,
    %22 = vector.extract_strided_slice %6 {offsets = [0, 32], sizes = [8, 32], strides = [1, 1]} : vector<8x96xf32> to vector<8x32xf32>
    %23 = vector.extract_strided_slice %22 {offsets = [0, 0], sizes = [8, 8], strides = [1, 1]} : vector<8x32xf32> to vector<8x8xf32>
    %24 = vector.extract_strided_slice %22 {offsets = [0, 8], sizes = [8, 8], strides = [1, 1]} : vector<8x32xf32> to vector<8x8xf32>
    %25 = vector.extract_strided_slice %22 {offsets = [0, 16], sizes = [8, 8], strides = [1, 1]} : vector<8x32xf32> to vector<8x8xf32>
    %26 = vector.extract_strided_slice %22 {offsets = [0, 24], sizes = [8, 8], strides = [1, 1]} : vector<8x32xf32> to vector<8x8xf32>
    %27 = vector.shape_cast %23 : vector<8x8xf32> to vector<1x8x8xf32>
    %28 = vector.shape_cast %24 : vector<8x8xf32> to vector<1x8x8xf32>
    %29 = vector.shape_cast %25 : vector<8x8xf32> to vector<1x8x8xf32>
    %30 = vector.shape_cast %26 : vector<8x8xf32> to vector<1x8x8xf32>
    %31 = tpu.concatenate %27, %28, %29, %30 in 0 : vector<1x8x8xf32>, vector<1x8x8xf32>, vector<1x8x8xf32>, vector<1x8x8xf32> -> vector<4x8x8xf32>
    %c0_11 = arith.constant 0 : index
    %c0_12 = arith.constant 0 : index
    %c0_13 = arith.constant 0 : index
    %c0_14 = arith.constant 0 : index
    %32 = vector.load %arg6[%c0_11, %c0_12, %c0_13, %c0_14] : memref<1x4x8x8xf32, #tpu.memory_space<vmem>>, vector<1x4x8x8xf32>
    %33 = vector.shape_cast %32 : vector<1x4x8x8xf32> to vector<4x8x8xf32>
    %34 = vector.shape_cast %31 : vector<4x8x8xf32> to vector<1x4x8x8xf32>
    tpu.vector_store %arg6[%c0_11, %c0_12, %c0_13, %c0_14], %34 {strides = array<i32>} : memref<1x4x8x8xf32, #tpu.memory_space<vmem>>, vector<1x4x8x8xf32>,
    %35 = vector.extract_strided_slice %6 {offsets = [0, 64], sizes = [8, 32], strides = [1, 1]} : vector<8x96xf32> to vector<8x32xf32>
    %36 = vector.extract_strided_slice %35 {offsets = [0, 0], sizes = [8, 8], strides = [1, 1]} : vector<8x32xf32> to vector<8x8xf32>
    %37 = vector.extract_strided_slice %35 {offsets = [0, 8], sizes = [8, 8], strides = [1, 1]} : vector<8x32xf32> to vector<8x8xf32>
    %38 = vector.extract_strided_slice %35 {offsets = [0, 16], sizes = [8, 8], strides = [1, 1]} : vector<8x32xf32> to vector<8x8xf32>
    %39 = vector.extract_strided_slice %35 {offsets = [0, 24], sizes = [8, 8], strides = [1, 1]} : vector<8x32xf32> to vector<8x8xf32>
    %40 = vector.shape_cast %36 : vector<8x8xf32> to vector<1x8x8xf32>
    %41 = vector.shape_cast %37 : vector<8x8xf32> to vector<1x8x8xf32>
    %42 = vector.shape_cast %38 : vector<8x8xf32> to vector<1x8x8xf32>
    %43 = vector.shape_cast %39 : vector<8x8xf32> to vector<1x8x8xf32>
    %44 = tpu.concatenate %40, %41, %42, %43 in 0 : vector<1x8x8xf32>, vector<1x8x8xf32>, vector<1x8x8xf32>, vector<1x8x8xf32> -> vector<4x8x8xf32>
    %c0_15 = arith.constant 0 : index
    %c0_16 = arith.constant 0 : index
    %c0_17 = arith.constant 0 : index
    %c0_18 = arith.constant 0 : index
    %45 = vector.load %arg7[%c0_15, %c0_16, %c0_17, %c0_18] : memref<1x4x8x8xf32, #tpu.memory_space<vmem>>, vector<1x4x8x8xf32>
    %46 = vector.shape_cast %45 : vector<1x4x8x8xf32> to vector<4x8x8xf32>
    %47 = vector.shape_cast %44 : vector<4x8x8xf32> to vector<1x4x8x8xf32>
    tpu.vector_store %arg7[%c0_15, %c0_16, %c0_17, %c0_18], %47 {strides = array<i32>} : memref<1x4x8x8xf32, #tpu.memory_space<vmem>>, vector<1x4x8x8xf32>,
    return
  }
  func.func @transform_0(%arg0: i32, %arg1: i32) -> (i32, i32, i32) {
    %c0_i32 = arith.constant 0 : i32
    %c0_i32_0 = arith.constant 0 : i32
    return %arg0, %arg1, %c0_i32 : i32, i32, i32
  }
  func.func @transform_1(%arg0: i32, %arg1: i32) -> (i32, i32) {
    %c0_i32 = arith.constant 0 : i32
    %c0_i32_0 = arith.constant 0 : i32
    %c0_i32_1 = arith.constant 0 : i32
    return %c0_i32, %c0_i32_0 : i32, i32
  }
  func.func @transform_2(%arg0: i32, %arg1: i32) -> (i32, i32) {
    %c0_i32 = arith.constant 0 : i32
    %c0_i32_0 = arith.constant 0 : i32
    %c0_i32_1 = arith.constant 0 : i32
    return %c0_i32, %c0_i32_0 : i32, i32
  }
  func.func @transform_3(%arg0: i32, %arg1: i32) -> (i32, i32, i32, i32) {
    %c0_i32 = arith.constant 0 : i32
    %c0_i32_0 = arith.constant 0 : i32
    %c0_i32_1 = arith.constant 0 : i32
    return %arg0, %c0_i32, %arg1, %c0_i32_0 : i32, i32, i32, i32
  }
  func.func @transform_4(%arg0: i32, %arg1: i32) -> (i32, i32, i32, i32) {
    %c0_i32 = arith.constant 0 : i32
    %c0_i32_0 = arith.constant 0 : i32
    %c0_i32_1 = arith.constant 0 : i32
    return %arg0, %c0_i32, %arg1, %c0_i32_0 : i32, i32, i32, i32
  }
  func.func @transform_5(%arg0: i32, %arg1: i32) -> (i32, i32, i32, i32) {
    %c0_i32 = arith.constant 0 : i32
    %c0_i32_0 = arith.constant 0 : i32
    %c0_i32_1 = arith.constant 0 : i32
    return %arg0, %c0_i32, %arg1, %c0_i32_0 : i32, i32, i32, i32
  }
}

</mosaic_0001>

<llo_original>
// kernel: tpu_custom_call.1
$region0: #{tpu_custom_call.1}
  #allocation0 [shape = 'u32[]', space=smem, size = 0x4, offset = 0x4, fixed_abs, tag = 'smem constant byte address 0x4 - core index']
  #allocation1 [shape = 'u32[144,128]{1,0:T(1,128)}', space=vmem, size = 0x12000, scoped, tag = 'internal scratch']
  %s0 = inlined_call_operand.hbm [shape: f32[2,8,32], index: 0, kind: input, shape index: {}]
  %s1 = inlined_call_operand.hbm [shape: f32[32,96], index: 1, kind: input, shape index: {}]
  %s2 = inlined_call_operand.vmem [shape: f32[1,96], index: 2, kind: input, shape index: {}]
  %s3 = inlined_call_operand.hbm [shape: f32[2,4,8,8], index: 3, kind: output, shape index: {0}]
  %s4 = inlined_call_operand.hbm [shape: f32[2,4,8,8], index: 4, kind: output, shape index: {1}]
  %s5 = inlined_call_operand.hbm [shape: f32[2,4,8,8], index: 5, kind: output, shape index: {2}]
  %6 = xla_tuple %s3, %s4, %s5
  %s7 = sld [smem:[#allocation0]]
  $region69: #{tpu_custom_call.1} parent=0
    _
  %s9 = ssub.s32 1, %s7
  %s10 = scalar_select 0, %s9, %s7
  $region1: #{tpu_custom_call.1} parent=0
    #allocation2 [shape = 'u8[8192]{0}', space=vmem, size = 0x2000, scoped, tag = 'input window, operand 0']
    #allocation3 [shape = 's32[2]{0}', space=sflag, size = 0x8, scoped, tag = 'scoped memory for tpu_custom_call.1']
    #allocation4 [shape = 's32[2]{0}', space=sflag, size = 0x8, scoped, tag = 'scoped memory for tpu_custom_call.1']
    #allocation5 [shape = 'u8[16384]{0}', space=vmem, size = 0x4000, scoped, tag = 'input window, operand 1, single buffered']
    #allocation6 [shape = 's32[1]{0}', space=sflag, size = 0x4, scoped, tag = 'scoped memory for tpu_custom_call.1']
    #allocation7 [shape = 'u8[32768]{0}', space=vmem, size = 0x8000, scoped, tag = 'output window, operand 0']
    #allocation8 [shape = 'u8[32768]{0}', space=vmem, size = 0x8000, scoped, tag = 'output window, operand 1']
    #allocation9 [shape = 's32[2]{0}', space=sflag, size = 0x8, scoped, tag = 'scoped memory for tpu_custom_call.1']
    #allocation10 [shape = 'u8[32768]{0}', space=vmem, size = 0x8000, scoped, tag = 'output window, operand 2']
    %11 = vsyncpa [#allocation3], 0
    %s12 = scalar_lea.sflag [#allocation3], 1
    %13 = vsyncpa %s12, 0
    %14 = vsyncpa [#allocation6], 0
    %15 = vsyncpa [#allocation4], 0
    %s16 = scalar_lea.sflag [#allocation4], 1
    %17 = vsyncpa %s16, 0
    %18 = vsyncpa [#allocation9], 0
    %s19 = scalar_lea.sflag [#allocation9], 1
    %20 = vsyncpa %s19, 0
    loop: start=0, step=1, limit=4
    $region2: #{tpu_custom_call.1} parent=1 // loop_pre_header
      _
    $region3: #{tpu_custom_call.1} parent=1 // loop_header
      %s22 = sphi 0, %s26
      %p23 = scmp.ge.s32.totalorder %s22, 4
      %s29 = sphi 0, %s41
      %s30 = sphi 0, %s37
      %s31 = sphi 0, %s29
      %s32 = sphi 0, %s30
      %s33 = sphi 0, %s31
      %s34 = sphi 0, %s32
      %s46 = sphi 0, %s48
      %s49 = sphi 0, %s46
      %s50 = sphi 0, %s49
      %s66 = sphi 0, %s50
      %s70 = sphi 0, %s70
      %s72 = sphi 0, %s70
      %s73 = sphi 0, %s72
      %s87 = sphi 0, %s73
      %s91 = sphi 0, %s91
      %s93 = sphi 0, %s91
      %s94 = sphi 0, %s93
      %s108 = sphi 0, %s94
      %s116 = sphi 0, %s118
      %s119 = sphi 0, %s116
      %s120 = sphi 0, %s119
      %s136 = sphi 0, %s120
      %s144 = sphi 0, %s146
      %s147 = sphi 0, %s144
      %s148 = sphi 0, %s147
      %s164 = sphi 0, %s148
      %s172 = sphi 0, %s174
      %s175 = sphi 0, %s172
      %s176 = sphi 0, %s175
      %s192 = sphi 0, %s176
    $region4: #{tpu_custom_call.1} parent=1 // loop_header_branch
      %25 = sbr.rel (%p23) target = $region8
    $region5: #{tpu_custom_call.1} parent=1 // loop_body
      %s27 = ssub.s32 %s22, 1
      %s28 = ssub.s32 %s22, 2
      %s35 = sadd.s32 1, %s30
      %p36 = scmp.ge.s32.totalorder %s35, 1
      %s37 = scalar_select %p36, 0, %s35
      %s38 = sadd.s32 1, %s29
      %s39 = scalar_select %p36, %s38, %s29
      %p40 = scmp.ge.s32.totalorder %s39, 2
      %s41 = scalar_select %p40, 0, %s39
      %s42 = ssub.s32 %s29, %s41
      %s43 = ssub.s32 %s30, %s37
      %s44 = sor.u32 %s42, %s43
      %p45 = scmp.eq.s32.totalorder %s44, 0
      %s47 = sadd.s32 %s46, 1
      %s48 = scalar_select %p45, %s46, %s47
      %p51 = pneg %p45
      %p52 = scmp.eq.s32.totalorder %s22, 1
      %p53 = por %p51, %p52
      %p54 = scmp.ne.s32.totalorder %s46, %s49
      %p55 = scmp.eq.s32.totalorder %s22, 0
      %p56 = por %p54, %p55
      %p57 = scmp.ne.s32.totalorder %s46, %s49
      %p58 = scmp.eq.s32.totalorder %s27, 1
      %p59 = por %p57, %p58
      %p60 = scmp.ne.s32.totalorder %s49, %s50
      %p61 = scmp.eq.s32.totalorder %s27, 0
      %p62 = por %p60, %p61
      %p63 = scmp.ne.s32.totalorder %s49, %s50
      %p64 = scmp.eq.s32.totalorder %s28, 1
      %p65 = por %p63, %p64
      %p67 = scmp.ne.s32.totalorder %s50, %s66
      %p68 = scmp.eq.s32.totalorder %s28, 0
      %p69 = por %p67, %p68
      %s71 = sadd.s32 %s70, 1
      %p74 = scmp.eq.s32.totalorder %s22, 1
      %p75 = scmp.ne.s32.totalorder %s70, %s72
      %p76 = scmp.eq.s32.totalorder %s22, 0
      %p77 = por %p75, %p76
      %p78 = scmp.ne.s32.totalorder %s70, %s72
      %p79 = scmp.eq.s32.totalorder %s27, 1
      %p80 = por %p78, %p79
      %p81 = scmp.ne.s32.totalorder %s72, %s73
      %p82 = scmp.eq.s32.totalorder %s27, 0
      %p83 = por %p81, %p82
      %p84 = scmp.ne.s32.totalorder %s72, %s73
      %p85 = scmp.eq.s32.totalorder %s28, 1
      %p86 = por %p84, %p85
      %p88 = scmp.ne.s32.totalorder %s73, %s87
      %p89 = scmp.eq.s32.totalorder %s28, 0
      %p90 = por %p88, %p89
      %s92 = sadd.s32 %s91, 1
      %p95 = scmp.eq.s32.totalorder %s22, 1
      %p96 = scmp.ne.s32.totalorder %s91, %s93
      %p97 = scmp.eq.s32.totalorder %s22, 0
      %p98 = por %p96, %p97
      %p99 = scmp.ne.s32.totalorder %s91, %s93
      %p100 = scmp.eq.s32.totalorder %s27, 1
      %p101 = por %p99, %p100
      %p102 = scmp.ne.s32.totalorder %s93, %s94
      %p103 = scmp.eq.s32.totalorder %s27, 0
      %p104 = por %p102, %p103
      %p105 = scmp.ne.s32.totalorder %s93, %s94
      %p106 = scmp.eq.s32.totalorder %s28, 1
      %p107 = por %p105, %p106
      %p109 = scmp.ne.s32.totalorder %s94, %s108
      %p110 = scmp.eq.s32.totalorder %s28, 0
      %p111 = por %p109, %p110
      %s112 = ssub.s32 %s29, %s41
      %s113 = ssub.s32 %s30, %s37
      %s114 = sor.u32 %s112, %s113
      %p115 = scmp.eq.s32.totalorder %s114, 0
      %s117 = sadd.s32 %s116, 1
      %s118 = scalar_select %p115, %s116, %s117
      %p121 = pneg %p115
      %p122 = scmp.eq.s32.totalorder %s22, 1
      %p123 = por %p121, %p122
      %p124 = scmp.ne.s32.totalorder %s116, %s119
      %p125 = scmp.eq.s32.totalorder %s22, 0
      %p126 = por %p124, %p125
      %p127 = scmp.ne.s32.totalorder %s116, %s119
      %p128 = scmp.eq.s32.totalorder %s27, 1
      %p129 = por %p127, %p128
      %p130 = scmp.ne.s32.totalorder %s119, %s120
      %p131 = scmp.eq.s32.totalorder %s27, 0
      %p132 = por %p130, %p131
      %p133 = scmp.ne.s32.totalorder %s119, %s120
      %p134 = scmp.eq.s32.totalorder %s28, 1
      %p135 = por %p133, %p134
      %p137 = scmp.ne.s32.totalorder %s120, %s136
      %p138 = scmp.eq.s32.totalorder %s28, 0
      %p139 = por %p137, %p138
      %s140 = ssub.s32 %s29, %s41
      %s141 = ssub.s32 %s30, %s37
      %s142 = sor.u32 %s140, %s141
      %p143 = scmp.eq.s32.totalorder %s142, 0
      %s145 = sadd.s32 %s144, 1
      %s146 = scalar_select %p143, %s144, %s145
      %p149 = pneg %p143
      %p150 = scmp.eq.s32.totalorder %s22, 1
      %p151 = por %p149, %p150
      %p152 = scmp.ne.s32.totalorder %s144, %s147
      %p153 = scmp.eq.s32.totalorder %s22, 0
      %p154 = por %p152, %p153
      %p155 = scmp.ne.s32.totalorder %s144, %s147
      %p156 = scmp.eq.s32.totalorder %s27, 1
      %p157 = por %p155, %p156
      %p158 = scmp.ne.s32.totalorder %s147, %s148
      %p159 = scmp.eq.s32.totalorder %s27, 0
      %p160 = por %p158, %p159
      %p161 = scmp.ne.s32.totalorder %s147, %s148
      %p162 = scmp.eq.s32.totalorder %s28, 1
      %p163 = por %p161, %p162
      %p165 = scmp.ne.s32.totalorder %s148, %s164
      %p166 = scmp.eq.s32.totalorder %s28, 0
      %p167 = por %p165, %p166
      %s168 = ssub.s32 %s29, %s41
      %s169 = ssub.s32 %s30, %s37
      %s170 = sor.u32 %s168, %s169
      %p171 = scmp.eq.s32.totalorder %s170, 0
      %s173 = sadd.s32 %s172, 1
      %s174 = scalar_select %p171, %s172, %s173
      %p177 = pneg %p171
      %p178 = scmp.eq.s32.totalorder %s22, 1
      %p179 = por %p177, %p178
      %p180 = scmp.ne.s32.totalorder %s172, %s175
      %p181 = scmp.eq.s32.totalorder %s22, 0
      %p182 = por %p180, %p181
      %p183 = scmp.ne.s32.totalorder %s172, %s175
      %p184 = scmp.eq.s32.totalorder %s27, 1
      %p185 = por %p183, %p184
      %p186 = scmp.ne.s32.totalorder %s175, %s176
      %p187 = scmp.eq.s32.totalorder %s27, 0
      %p188 = por %p186, %p187
      %p189 = scmp.ne.s32.totalorder %s175, %s176
      %p190 = scmp.eq.s32.totalorder %s28, 1
      %p191 = por %p189, %p190
      %p193 = scmp.ne.s32.totalorder %s176, %s192
      %p194 = scmp.eq.s32.totalorder %s28, 0
      %p195 = por %p193, %p194
      %p196 = scmp.le.s32.totalorder 1, %s22
      %p197 = scmp.lt.s32.totalorder %s22, 3
      %p198 = pnand %p196, %p197
      %p199 = pneg %p198
      // Predicated region
      $region9: #{tpu_custom_call.1} parent=5 // pred_check
        _
      $region10: #{tpu_custom_call.1} parent=5 // pred_check_branch
        %201 = sbr.rel (%p198) target = $region12
      $region11: #{tpu_custom_call.1} parent=5 // pred_region
        %s202 = ssub.s32 %s22, 1
        // Predicated region
        $region13: #{tpu_custom_call.1} parent=11 // pred_check
          %p203 = pneg %p83
        $region14: #{tpu_custom_call.1} parent=11 // pred_check_branch
          %205 = sbr.rel (%p203) target = $region16
        $region15: #{tpu_custom_call.1} parent=11 // pred_region
          %s207 = ssub.s32 512, 512
          %208 = vsyncadd [#allocation6], %s207
          %s209 = sshll.u32 [#allocation5], 4
          %s210 = int_to_ptr.vmem [resolvable:$true] %s209
          %215 = dma.hbm_to_vmem [thread:$0]  %s1, 512, %s210, [#allocation6], 128, 128, 8
        $region16: #{tpu_custom_call.1} parent=11 // pred_fallthru
          _
        // Predicated region
        $region17: #{tpu_custom_call.1} parent=11 // pred_check
          %p216 = pneg %p104
        $region18: #{tpu_custom_call.1} parent=11 // pred_check_branch
          %218 = sbr.rel (%p216) target = $region20
        $region19: #{tpu_custom_call.1} parent=11 // pred_region
          _
        $region20: #{tpu_custom_call.1} parent=11 // pred_fallthru
          _
      $region12: #{tpu_custom_call.1} parent=5 // pred_fallthru
        _
      %p219 = scmp.lt.s32.totalorder %s22, 2
      // Predicated region
      $region21: #{tpu_custom_call.1} parent=5 // pred_check
        %p220 = pneg %p219
      $region22: #{tpu_custom_call.1} parent=5 // pred_check_branch
        %222 = sbr.rel (%p220) target = $region24
      $region23: #{tpu_custom_call.1} parent=5 // pred_region
        // Predicated region
        $region25: #{tpu_custom_call.1} parent=23 // pred_check
          %p223 = pneg %p56
        $region26: #{tpu_custom_call.1} parent=23 // pred_check_branch
          %225 = sbr.rel (%p223) target = $region28
        $region27: #{tpu_custom_call.1} parent=23 // pred_region
          %s226 = sand.u32 %s46, 1
          %s227 = scalar_lea.sflag [#allocation3], %s226
          %s228 = sand.u32 %s46, 1
          %s229 = smul.addr %s228, 8
          %s230 = scalar_lea.vmem [#allocation2], %s229
          %s232 = ssub.s32 128, 128
          %233 = vsyncadd %s227, %s232
          %s234 = sadd.s32 %s30, %s29
          %s235 = smul.addr %s234, 128
          %s236 = scalar_lea.hbm %s0, %s235
          %s238 = sshll.u32 %s230, 4
          %s239 = int_to_ptr.vmem [resolvable:$true] %s238
          %241 = dma.hbm_to_vmem [thread:$0]  %s236, 128, %s239, %s227
        $region28: #{tpu_custom_call.1} parent=23 // pred_fallthru
          _
      $region24: #{tpu_custom_call.1} parent=5 // pred_fallthru
        _
      %p242 = scmp.le.s32.totalorder 1, %s22
      %p243 = scmp.lt.s32.totalorder %s22, 3
      %p244 = pnand %p242, %p243
      %p245 = pneg %p244
      // Predicated region
      $region29: #{tpu_custom_call.1} parent=5 // pred_check
        _
      $region30: #{tpu_custom_call.1} parent=5 // pred_check_branch
        %247 = sbr.rel (%p244) target = $region32
      $region31: #{tpu_custom_call.1} parent=5 // pred_region
        %s248 = ssub.s32 %s22, 1
        %s249 = sand.u32 %s49, 1
        %s250 = scalar_lea.sflag [#allocation3], %s249
        %s251 = sand.u32 %s49, 1
        %s252 = smul.addr %s251, 8
        %s253 = scalar_lea.vmem [#allocation2], %s252
        // Predicated region
        $region33: #{tpu_custom_call.1} parent=31 // pred_check
          %p254 = pneg %p62
        $region34: #{tpu_custom_call.1} parent=31 // pred_check_branch
          %256 = sbr.rel (%p254) target = $region36
        $region35: #{tpu_custom_call.1} parent=31 // pred_region
          %257 = dma.done %s250, 128
        $region36: #{tpu_custom_call.1} parent=31 // pred_fallthru
          _
        // Predicated region
        $region37: #{tpu_custom_call.1} parent=31 // pred_check
          %p258 = pneg %p83
        $region38: #{tpu_custom_call.1} parent=31 // pred_check_branch
          %260 = sbr.rel (%p258) target = $region40
        $region39: #{tpu_custom_call.1} parent=31 // pred_region
          %261 = dma.done [#allocation6], 512
        $region40: #{tpu_custom_call.1} parent=31 // pred_fallthru
          _
        %s262 = sand.u32 %s49, 1
        %s263 = scalar_lea.sflag [#allocation3], %s262
        %s264 = sand.u32 %s49, 1
        %s265 = smul.addr %s264, 8
        %s266 = scalar_lea.vmem [#allocation2], %s265
        %p267 = pneg %p62
        %p268 = pneg %p59
        %p269 = pneg %p83
        %p270 = pneg %p80
        %p271 = pneg %p104
        %p272 = pneg %p101
        %p273 = pneg %p132
        %p274 = pneg %p129
        %s275 = sand.u32 %s119, 1
        %s276 = scalar_lea.sflag [#allocation4], %s275
        %s277 = sand.u32 %s119, 1
        %s278 = smul.addr %s277, 32
        %s279 = scalar_lea.vmem [#allocation7], %s278
        %p280 = pneg %p160
        %p281 = pneg %p157
        %s282 = sand.u32 %s27, 1
        %s283 = scalar_lea.sflag [#allocation9], %s282
        %s284 = sand.u32 %s147, 1
        %s285 = smul.addr %s284, 32
        %s286 = scalar_lea.vmem [#allocation8], %s285
        %p287 = pneg %p188
        %p288 = pneg %p185
        %s289 = sand.u32 %s27, 1
        %s290 = scalar_lea.sflag [#allocation9], %s289
        %s291 = sand.u32 %s175, 1
        %s292 = smul.addr %s291, 32
        %s293 = scalar_lea.vmem [#allocation10], %s292
        %v294 = vld [vmem:[%s253] sm:$0xff]
        %v295 = vld [vmem:[#allocation5] sm:$0xff]
        %v296 = vld [vmem:[#allocation5 + $0x8] sm:$0xff]
        %v297 = vld [vmem:[#allocation5 + $0x10] sm:$0xff]
        %v298 = vld [vmem:[#allocation5 + $0x18] sm:$0xff]
        %v299 = vld [vmem:[%s2] sm:$0x1]
        %v301 = vlaneseq
        %v302 = vshrl.u32 %v301, 7
        %v303 = vsub.s32 0, %v302
        %v304 = vrot.slane %v299, %v303
        %vm306 = vcmask 261120
        %v308 = vsel %vm306, %v294, 0
        %310 = vmatprep.subr.mxu0 0.0
        %311 = vmatpush1.msra.mxu0 0.0
        %312 = vmatprep.subr.mxu0 0.0
        %313 = vmatpush1.msra.mxu0 0.0
        %314 = vmatprep.subr.mxu0 0.0
        %315 = vmatpush1.msra.mxu0 0.0
        %316 = vmatprep.subr.mxu0 0.0
        %317 = vmatpush1.msra.mxu0 0.0
        %318 = vmatprep.subr.mxu0 0.0
        %319 = vmatpush1.msra.mxu0 0.0
        %320 = vmatprep.subr.mxu0 0.0
        %321 = vmatpush1.msra.mxu0 0.0
        %322 = vmatprep.subr.mxu0 0.0
        %323 = vmatpush1.msra.mxu0 0.0
        %324 = vmatprep.subr.mxu0 0.0
        %325 = vmatpush1.msra.mxu0 0.0
        %326 = vmatprep.subr.mxu0 0.0
        %327 = vmatpush1.msra.mxu0 0.0
        %328 = vmatprep.subr.mxu0 0.0
        %329 = vmatpush1.msra.mxu0 0.0
        %330 = vmatprep.subr.mxu0 0.0
        %331 = vmatpush1.msra.mxu0 0.0
        %332 = vmatprep.subr.mxu0 0.0
        %333 = vmatpush1.msra.mxu0 0.0
        %334 = vmatprep.subr.mxu0 0.0
        %335 = vmatpush1.msra.mxu0 %v298
        %336 = vmatprep.subr.mxu0 0.0
        %337 = vmatpush1.msra.mxu0 %v297
        %338 = vmatprep.subr.mxu0 0.0
        %339 = vmatpush1.msra.mxu0 %v296
        %340 = vmatprep.subr.mxu0 0.0
        %341 = vmatpush1.msra.mxu0 %v295
        %342 = vmatprep.subr.mxu0 0.0
        %343 = vmatpush2.msra.mxu0 0.0
        %344 = vmatprep.subr.mxu0 0.0
        %345 = vmatpush2.msra.mxu0 0.0
        %346 = vmatprep.subr.mxu0 0.0
        %347 = vmatpush2.msra.mxu0 0.0
        %348 = vmatprep.subr.mxu0 0.0
        %349 = vmatpush2.msra.mxu0 0.0
        %350 = vmatprep.subr.mxu0 0.0
        %351 = vmatpush2.msra.mxu0 0.0
        %352 = vmatprep.subr.mxu0 0.0
        %353 = vmatpush2.msra.mxu0 0.0
        %354 = vmatprep.subr.mxu0 0.0
        %355 = vmatpush2.msra.mxu0 0.0
        %356 = vmatprep.subr.mxu0 0.0
        %357 = vmatpush2.msra.mxu0 0.0
        %358 = vmatprep.subr.mxu0 0.0
        %359 = vmatpush2.msra.mxu0 0.0
        %360 = vmatprep.subr.mxu0 0.0
        %361 = vmatpush2.msra.mxu0 0.0
        %362 = vmatprep.subr.mxu0 0.0
        %363 = vmatpush2.msra.mxu0 0.0
        %364 = vmatprep.subr.mxu0 0.0
        %365 = vmatpush2.msra.mxu0 0.0
        %366 = vmatprep.subr.mxu0 0.0
        %367 = vmatpush2.msra.mxu0 0.0
        %368 = vmatprep.subr.mxu0 0.0
        %369 = vmatpush2.msra.mxu0 0.0
        %370 = vmatprep.subr.mxu0 0.0
        %371 = vmatpush2.msra.mxu0 0.0
        %372 = vmatprep.subr.mxu0 0.0
        %373 = vmatpush2.msra.mxu0 0.0
        %374 = vmatprep.mubr.f32.mxu0 0.0
        %375 = vmatmul.mubr.f32.gmra.mxu0 %v308
        %v376 = vpop.f32.mrf.mxu0
        %v377 = vadd.f32 %v304, %v376
        %v378 = vpop.f32.mrf.mxu0
        %379 = vdwg.mxu0
        %v380 = vmul.f32 %v377, 0.35355338
        %382 = vrot.lane.b32.xlu0 %v380, 120
        %v383 = vpop.permute.xlu0 %382
        %385 = vrot.lane.b32.xlu0 %v380, 112
        %v386 = vpop.permute.xlu0 %385
        %388 = vrot.lane.b32.xlu0 %v380, 104
        %v389 = vpop.permute.xlu0 %388
        %vm391 = vcmask 64512
        %392 = vst.msk [vmem:[%s279] sm:$0xff] %vm391, %v380
        %393 = vst.msk [vmem:[%s279 + $0x8] sm:$0xff] %vm391, %v383
        %394 = vst.msk [vmem:[%s279 + $0x10] sm:$0xff] %vm391, %v386
        %395 = vst.msk [vmem:[%s279 + $0x18] sm:$0xff] %vm391, %v389
        %397 = vrot.lane.b32.xlu0 %v377, 120
        %v398 = vpop.permute.xlu0 %397
        %399 = vrot.lane.b32.xlu0 %v377, 112
        %v400 = vpop.permute.xlu0 %399
        %401 = vrot.lane.b32.xlu0 %v377, 104
        %v402 = vpop.permute.xlu0 %401
        %403 = vrot.lane.b32.xlu0 %v377, 96
        %v404 = vpop.permute.xlu0 %403
        %405 = vrot.lane.b32.xlu0 %v398, 96
        %v406 = vpop.permute.xlu0 %405
        %407 = vrot.lane.b32.xlu0 %v400, 96
        %v408 = vpop.permute.xlu0 %407
        %409 = vrot.lane.b32.xlu0 %v402, 96
        %v410 = vpop.permute.xlu0 %409
        %415 = vst.msk [vmem:[%s286] sm:$0xff] %vm391, %v404
        %416 = vst.msk [vmem:[%s286 + $0x8] sm:$0xff] %vm391, %v406
        %417 = vst.msk [vmem:[%s286 + $0x10] sm:$0xff] %vm391, %v408
        %418 = vst.msk [vmem:[%s286 + $0x18] sm:$0xff] %vm391, %v410
        %419 = vrot.lane.b32.xlu0 %v377, 64
        %v420 = vpop.permute.xlu0 %419
        %421 = vrot.lane.b32.xlu0 %v398, 64
        %v422 = vpop.permute.xlu0 %421
        %423 = vrot.lane.b32.xlu0 %v400, 64
        %v424 = vpop.permute.xlu0 %423
        %425 = vrot.lane.b32.xlu0 %v402, 64
        %v426 = vpop.permute.xlu0 %425
        %431 = vst.msk [vmem:[%s293] sm:$0xff] %vm391, %v420
        %432 = vst.msk [vmem:[%s293 + $0x8] sm:$0xff] %vm391, %v422
        %433 = vst.msk [vmem:[%s293 + $0x10] sm:$0xff] %vm391, %v424
        %434 = vst.msk [vmem:[%s293 + $0x18] sm:$0xff] %vm391, %v426
        %s435 = sand.u32 %s119, 1
        %s436 = scalar_lea.sflag [#allocation4], %s435
        %s437 = sand.u32 %s119, 1
        %s438 = smul.addr %s437, 32
        %s439 = scalar_lea.vmem [#allocation7], %s438
        %s440 = sand.u32 %s27, 1
        %s441 = scalar_lea.sflag [#allocation9], %s440
        %s442 = sand.u32 %s147, 1
        %s443 = smul.addr %s442, 32
        %s444 = scalar_lea.vmem [#allocation8], %s443
        %s445 = sand.u32 %s27, 1
        %s446 = scalar_lea.sflag [#allocation9], %s445
        %s447 = sand.u32 %s175, 1
        %s448 = smul.addr %s447, 32
        %s449 = scalar_lea.vmem [#allocation10], %s448
        // Predicated region
        $region41: #{tpu_custom_call.1} parent=31 // pred_check
          %p450 = pneg %p129
        $region42: #{tpu_custom_call.1} parent=31 // pred_check_branch
          %452 = sbr.rel (%p450) target = $region44
        $region43: #{tpu_custom_call.1} parent=31 // pred_region
          %s454 = ssub.s32 512, 512
          %455 = vsyncadd %s436, %s454
          %s456 = smul.addr %s31, 4
          %s457 = sadd.s32 %s32, %s456
          %s458 = smul.addr %s457, 128
          %s459 = scalar_lea.hbm %s3, %s458
          %s460 = sshll.u32 %s439, 4
          %s461 = int_to_ptr.vmem [resolvable:$true] %s460
          %466 = dma.vmem_to_hbm [thread:$0]  %s461, 512, %s459, %s436, 128, 128, 8
        $region44: #{tpu_custom_call.1} parent=31 // pred_fallthru
          _
        // Predicated region
        $region45: #{tpu_custom_call.1} parent=31 // pred_check
          %p467 = pneg %p157
        $region46: #{tpu_custom_call.1} parent=31 // pred_check_branch
          %469 = sbr.rel (%p467) target = $region48
        $region47: #{tpu_custom_call.1} parent=31 // pred_region
          %s471 = ssub.s32 512, 512
          %472 = vsyncadd %s441, %s471
          %s473 = smul.addr %s31, 4
          %s474 = sadd.s32 %s32, %s473
          %s475 = smul.addr %s474, 128
          %s476 = scalar_lea.hbm %s4, %s475
          %s477 = sshll.u32 %s444, 4
          %s478 = int_to_ptr.vmem [resolvable:$true] %s477
          %483 = dma.vmem_to_hbm [thread:$0]  %s478, 512, %s476, %s441, 128, 128, 8
        $region48: #{tpu_custom_call.1} parent=31 // pred_fallthru
          _
        // Predicated region
        $region49: #{tpu_custom_call.1} parent=31 // pred_check
          %p484 = pneg %p185
        $region50: #{tpu_custom_call.1} parent=31 // pred_check_branch
          %486 = sbr.rel (%p484) target = $region52
        $region51: #{tpu_custom_call.1} parent=31 // pred_region
          %s488 = ssub.s32 512, 512
          %489 = vsyncadd %s446, %s488
          %s490 = smul.addr %s31, 4
          %s491 = sadd.s32 %s32, %s490
          %s492 = smul.addr %s491, 128
          %s493 = scalar_lea.hbm %s5, %s492
          %s494 = sshll.u32 %s449, 4
          %s495 = int_to_ptr.vmem [resolvable:$true] %s494
          %500 = dma.vmem_to_hbm [thread:$0]  %s495, 512, %s493, %s446, 128, 128, 8
        $region52: #{tpu_custom_call.1} parent=31 // pred_fallthru
          _
      $region32: #{tpu_custom_call.1} parent=5 // pred_fallthru
        _
      %p501 = scmp.le.s32.totalorder 2, %s22
      // Predicated region
      $region53: #{tpu_custom_call.1} parent=5 // pred_check
        %p502 = pneg %p501
      $region54: #{tpu_custom_call.1} parent=5 // pred_check_branch
        %504 = sbr.rel (%p502) target = $region56
      $region55: #{tpu_custom_call.1} parent=5 // pred_region
        %s505 = ssub.s32 %s22, 2
        // Predicated region
        $region57: #{tpu_custom_call.1} parent=55 // pred_check
          %p506 = pneg %p135
        $region58: #{tpu_custom_call.1} parent=55 // pred_check_branch
          %508 = sbr.rel (%p506) target = $region60
        $region59: #{tpu_custom_call.1} parent=55 // pred_region
          %s509 = sand.u32 %s120, 1
          %s510 = scalar_lea.sflag [#allocation4], %s509
          %s511 = sand.u32 %s120, 1
          %s512 = smul.addr %s511, 32
          %s513 = scalar_lea.vmem [#allocation7], %s512
          %514 = dma.done %s510, 512
        $region60: #{tpu_custom_call.1} parent=55 // pred_fallthru
          _
        // Predicated region
        $region61: #{tpu_custom_call.1} parent=55 // pred_check
          %p515 = pneg %p163
        $region62: #{tpu_custom_call.1} parent=55 // pred_check_branch
          %517 = sbr.rel (%p515) target = $region64
        $region63: #{tpu_custom_call.1} parent=55 // pred_region
          %s518 = sand.u32 %s28, 1
          %s519 = scalar_lea.sflag [#allocation9], %s518
          %s520 = sand.u32 %s148, 1
          %s521 = smul.addr %s520, 32
          %s522 = scalar_lea.vmem [#allocation8], %s521
          %523 = dma.done %s519, 512
        $region64: #{tpu_custom_call.1} parent=55 // pred_fallthru
          _
        // Predicated region
        $region65: #{tpu_custom_call.1} parent=55 // pred_check
          %p524 = pneg %p191
        $region66: #{tpu_custom_call.1} parent=55 // pred_check_branch
          %526 = sbr.rel (%p524) target = $region68
        $region67: #{tpu_custom_call.1} parent=55 // pred_region
          %s527 = sand.u32 %s28, 1
          %s528 = scalar_lea.sflag [#allocation9], %s527
          %s529 = sand.u32 %s176, 1
          %s530 = smul.addr %s529, 32
          %s531 = scalar_lea.vmem [#allocation10], %s530
          %532 = dma.done %s528, 512
        $region68: #{tpu_custom_call.1} parent=55 // pred_fallthru
          _
      $region56: #{tpu_custom_call.1} parent=5 // pred_fallthru
        _
    $region6: #{tpu_custom_call.1} parent=1 // loop_footer
      %s26 = sadd.s32 1, %s22
    $region7: #{tpu_custom_call.1} parent=1 // loop_footer_branch
      %21 = sbr.rel target = $region3
    $region8: #{tpu_custom_call.1} parent=1 // loop_exit
      _
    %533 = vsyncpa [#allocation3], 1
    %s534 = scalar_lea.sflag [#allocation3], 1
    %535 = vsyncpa %s534, 1
    %536 = vsyncpa [#allocation6], 1
    %537 = vsyncpa [#allocation4], 1
    %s538 = scalar_lea.sflag [#allocation4], 1
    %539 = vsyncpa %s538, 1
    %540 = vsyncpa [#allocation9], 1
    %s541 = scalar_lea.sflag [#allocation9], 1
    %542 = vsyncpa %s541, 1

</llo_original>
